<compile_context>
chip_gen: v5e
topology: v5e:2x2
jax: 0.10.0
libtpu: 0.0.40
codegen_flags: <defaults>
</compile_context>

<pallas_src>
import functools
import math

import jax
import jax.numpy as jnp
from jax import lax
from jax.experimental import pallas as pl
from jax.experimental.pallas import tpu as pltpu

# Sentinel that is exactly representable in both f32 and bf16 (power of two),
# so max / cast round-trips are lossless and the online-softmax rescaling stays
# consistent for destinations that have not been seen yet.
_NEG_BIG = -(2.0 ** 99)


def _round_up(x, m):
    return (x + m - 1) // m * m


def _pad2d(a, rows, cols):
    out = jnp.zeros((rows, cols), a.dtype)
    return out.at[: a.shape[0], : a.shape[1]].set(a)


# ---------------------------------------------------------------------------
# Kernel 1: fused [q | k | v | skip] projection, node-tiled matmul.
# ---------------------------------------------------------------------------
def _proj_kernel(x_ref, w_ref, b_ref, q_ref, k_ref, v_ref, skip_ref, *, c_pad):
    f32, bf16 = jnp.float32, jnp.bfloat16
    proj = jnp.dot(x_ref[...], w_ref[...], preferred_element_type=f32) + b_ref[...]
    q_ref[...] = proj[:, 0 * c_pad:1 * c_pad].astype(bf16)
    k_ref[...] = proj[:, 1 * c_pad:2 * c_pad].astype(bf16)
    v_ref[...] = proj[:, 2 * c_pad:3 * c_pad].astype(bf16)
    skip_ref[...] = proj[:, 3 * c_pad:4 * c_pad]


def _project(x_p, w_fused, b_fused, c_pad, *, tile_n=128):
    n_pad, cin_pad = x_p.shape
    f32, bf16 = jnp.float32, jnp.bfloat16
    oshape = lambda dt: jax.ShapeDtypeStruct((n_pad, c_pad), dt)
    ospec = pl.BlockSpec((tile_n, c_pad), lambda i: (i, 0))
    return pl.pallas_call(
        functools.partial(_proj_kernel, c_pad=c_pad),
        out_shape=(oshape(bf16), oshape(bf16), oshape(bf16), oshape(f32)),
        grid_spec=pltpu.PrefetchScalarGridSpec(
            num_scalar_prefetch=0,
            grid=(n_pad // tile_n,),
            in_specs=[
                pl.BlockSpec((tile_n, cin_pad), lambda i: (i, 0)),
                pl.BlockSpec((cin_pad, 4 * c_pad), lambda i: (0, 0)),
                pl.BlockSpec((1, 4 * c_pad), lambda i: (0, 0)),
            ],
            out_specs=[ospec, ospec, ospec, ospec],
        ),
        compiler_params=pltpu.CompilerParams(dimension_semantics=("parallel",)),
    )(x_p, w_fused, b_fused)


# ---------------------------------------------------------------------------
# Kernel 2: single-pass edge-chunk attention with online segment softmax.
# Accumulator is kept transposed (C_pad, N_pad); m / l are (1, N_pad) rows.
# ---------------------------------------------------------------------------
def _attn_kernel(src_ref, dst_ref, ea_ref, q_ref, k_ref, v_ref, we_ref,
                 out_ref, m_s, l_s, *, scale, n_pad):
    f32, bf16 = jnp.float32, jnp.bfloat16
    c = pl.program_id(0)

    @pl.when(c == 0)
    def _init():
        m_s[...] = jnp.full_like(m_s, _NEG_BIG)
        l_s[...] = jnp.zeros_like(l_s)
        out_ref[...] = jnp.zeros_like(out_ref)

    ec = src_ref.shape[0]
    node_iota = lax.broadcasted_iota(jnp.int32, (ec, n_pad), 1)
    s_mask = src_ref[...] == node_iota            # (EC, N_pad) one-hot rows
    t_mask = dst_ref[...] == node_iota            # padded edges (-1) -> all-zero rows
    s_bf = s_mask.astype(bf16)
    t_bf = t_mask.astype(bf16)

    # Edge-feature projection and one-hot (MXU) gathers k[src], q[dst], v[src].
    e_feat = jnp.dot(ea_ref[...], we_ref[...], preferred_element_type=f32)
    k_src = jnp.dot(s_bf, k_ref[...], preferred_element_type=f32)
    q_dst = jnp.dot(t_bf, q_ref[...], preferred_element_type=f32)
    v_src = jnp.dot(s_bf, v_ref[...], preferred_element_type=f32)

    # Per-edge raw attention score (EC, 1), f32.
    score = jnp.sum(q_dst * (k_src + e_feat), axis=-1, keepdims=True) * f32(scale)

    # Per-destination chunk max: the only remaining dense (EC, N_pad) lane pass,
    # done in bf16 (stored maxima stay bf16-exact so the MXU gather is lossless).
    neg_bf = jnp.asarray(_NEG_BIG, bf16)
    chunk_max = jnp.max(jnp.where(t_mask, score.astype(bf16), neg_bf),
                        axis=0, keepdims=True).astype(f32)        # (1, N_pad)

    m_old = m_s[...]
    m_new = jnp.maximum(m_old, chunk_max)
    corr = jnp.exp(jnp.minimum(m_old - m_new, 0.0))               # (1, N_pad)

    # Gather m_new[dst] per edge on the MXU (exact: one-hot x bf16-exact values).
    m_dst = lax.dot_general(t_bf, m_new.astype(bf16),
                            (((1,), (1,)), ((), ())),
                            preferred_element_type=f32)           # (EC, 1)

    p = jnp.exp(score - m_dst)                                    # (EC, 1) f32
    msg = ((v_src + e_feat) * p).astype(bf16)                     # (EC, C_pad)
    p_bf = p.astype(bf16)

    # Flash-style rescale of running accumulators + MXU scatter-add of this chunk.
    out_ref[...] = out_ref[...] * corr + lax.dot_general(
        msg, t_bf, (((0,), (0,)), ((), ())), preferred_element_type=f32)
    l_s[...] = l_s[...] * corr + lax.dot_general(
        p_bf, t_bf, (((0,), (0,)), ((), ())), preferred_element_type=f32)
    m_s[...] = m_new

    @pl.when(c == pl.num_programs(0) - 1)
    def _finalize():
        l = l_s[...]
        # Destinations with no incoming edges keep 0 (skip is added in the wrapper).
        inv = jnp.where(l > 0.0, pl.reciprocal(l, approx=True), 0.0)
        out_ref[...] = out_ref[...] * inv


def transformerconv_forward(params, node_feats, edge_index, edge_attr, edge_dim,
                            *, edge_chunk=256):
    N, c_in = node_feats.shape
    E = int(edge_index.shape[1])
    c_out = params["wq"].shape[1]

    if edge_attr is None:
        # Mirrors the PyTorch wrapper: torch.zeros(edge_index.shape[1], edge_dim).
        edge_attr = jnp.zeros((E, edge_dim), jnp.float32)

    assert edge_chunk % 8 == 0
    lane = 128
    c_pad = _round_up(c_out, lane)
    cin_pad = _round_up(c_in, lane)
    ed_pad = _round_up(edge_dim, lane)
    n_pad = _round_up(N, lane)
    ec = edge_chunk
    e_pad = _round_up(max(E, 1), ec)
    n_chunks = e_pad // ec

    f32, bf16, i32 = jnp.float32, jnp.bfloat16, jnp.int32

    # Fused [q | k | v | skip] projection weights / packed bias (one wide matmul).
    w_fused = jnp.concatenate([
        _pad2d(params["wq"].astype(f32), cin_pad, c_pad),
        _pad2d(params["wk"].astype(f32), cin_pad, c_pad),
        _pad2d(params["wv"].astype(f32), cin_pad, c_pad),
        _pad2d(params["ws"].astype(f32), cin_pad, c_pad)], axis=1).astype(bf16)
    b_fused = jnp.concatenate([
        _pad2d(params["bq"].astype(f32), 1, c_pad),
        _pad2d(params["bk"].astype(f32), 1, c_pad),
        _pad2d(params["bv"].astype(f32), 1, c_pad),
        _pad2d(params["bs"].astype(f32), 1, c_pad)], axis=1)
    we_p = _pad2d(params["we"].astype(f32), ed_pad, c_pad).astype(bf16)

    x_p = _pad2d(node_feats.astype(f32), n_pad, cin_pad).astype(bf16)
    ea_p = _pad2d(edge_attr.astype(f32), e_pad, ed_pad).astype(bf16)

    # Edge index chunks; padded edges use -1 -> all-zero one-hot rows in-kernel.
    pad_ids = jnp.full((e_pad - E,), -1, i32)
    src = jnp.concatenate([edge_index[0].astype(i32), pad_ids]).reshape(e_pad, 1)
    dst = jnp.concatenate([edge_index[1].astype(i32), pad_ids]).reshape(e_pad, 1)

    # Kernel 1: projections (keeps x / W / skip out of VMEM during the edge loop).
    q_p, k_p, v_p, skip_p = _project(x_p, w_fused, b_fused, c_pad)

    # Explicit VMEM budget (residents double-buffered by the pipeline + margin).
    resident = 3 * n_pad * c_pad * 2 + ed_pad * c_pad * 2 + n_pad * c_pad * 4
    streamed = 2 * (2 * ec * lane * 4 + ec * ed_pad * 2)
    scratch = 2 * 8 * n_pad * 4
    vmem_limit = int(min(96 * 2 ** 20,
                         max(32 * 2 ** 20, 2 * (2 * resident + streamed + scratch))))

    kernel = functools.partial(_attn_kernel,
                               scale=1.0 / math.sqrt(c_out), n_pad=n_pad)

    out_t = pl.pallas_call(
        kernel,
        out_shape=jax.ShapeDtypeStruct((c_pad, n_pad), f32),
        grid_spec=pltpu.PrefetchScalarGridSpec(
            num_scalar_prefetch=0,
            grid=(n_chunks,),
            in_specs=[
                pl.BlockSpec((ec, 1), lambda c: (c, 0)),          # src indices
                pl.BlockSpec((ec, 1), lambda c: (c, 0)),          # dst indices
                pl.BlockSpec((ec, ed_pad), lambda c: (c, 0)),     # edge_attr chunk
                pl.BlockSpec((n_pad, c_pad), lambda c: (0, 0)),   # q (resident)
                pl.BlockSpec((n_pad, c_pad), lambda c: (0, 0)),   # k (resident)
                pl.BlockSpec((n_pad, c_pad), lambda c: (0, 0)),   # v (resident)
                pl.BlockSpec((ed_pad, c_pad), lambda c: (0, 0)),  # W_edge (resident)
            ],
            out_specs=pl.BlockSpec((c_pad, n_pad), lambda c: (0, 0)),
            scratch_shapes=[
                pltpu.VMEM((1, n_pad), f32),   # running per-destination max
                pltpu.VMEM((1, n_pad), f32),   # running softmax denominator
            ],
        ),
        compiler_params=pltpu.CompilerParams(
            dimension_semantics=("arbitrary",),
            vmem_limit_bytes=vmem_limit),
    )(src, dst, ea_p, q_p, k_p, v_p, we_p)

    # Un-transpose, strip padding, add the root/skip projection (PyG root_weight).
    return jnp.transpose(out_t)[:N, :c_out] + skip_p[:N, :c_out]


def init_params(key, c_in, c_out, edge_dim):
    ks = jax.random.split(key, 9)
    sc_in = 1.0 / math.sqrt(c_in)
    sc_e = 1.0 / math.sqrt(edge_dim)
    u = lambda k, shape, s: jax.random.uniform(k, shape, jnp.float32, -s, s)
    return {
        "wq": u(ks[0], (c_in, c_out), sc_in), "bq": u(ks[1], (1, c_out), sc_in),
        "wk": u(ks[2], (c_in, c_out), sc_in), "bk": u(ks[3], (1, c_out), sc_in),
        "wv": u(ks[4], (c_in, c_out), sc_in), "bv": u(ks[5], (1, c_out), sc_in),
        "we": u(ks[6], (edge_dim, c_out), sc_e),
        "ws": u(ks[7], (c_in, c_out), sc_in), "bs": u(ks[8], (1, c_out), sc_in),
    }


def transformerconv_reference(params, x, edge_index, edge_attr, edge_dim):
    """Pure-JAX reference of PyG TransformerConv (heads=1) for validation."""
    E = edge_index.shape[1]
    if edge_attr is None:
        edge_attr = jnp.zeros((E, edge_dim), jnp.float32)
    c_out = params["wq"].shape[1]
    q = x @ params["wq"] + params["bq"]
    k = x @ params["wk"] + params["bk"]
    v = x @ params["wv"] + params["bv"]
    e = edge_attr @ params["we"]
    skip = x @ params["ws"] + params["bs"]
    src, dst = edge_index[0], edge_index[1]
    s = jnp.sum(q[dst] * (k[src] + e), axis=-1) / math.sqrt(c_out)
    N = x.shape[0]
    m = jnp.full((N,), -jnp.inf, jnp.float32).at[dst].max(s)
    p = jnp.exp(s - m[dst])
    denom = jnp.zeros((N,), jnp.float32).at[dst].add(p)
    alpha = p / denom[dst]
    msg = alpha[:, None] * (v[src] + e)
    agg = jnp.zeros((N, c_out), jnp.float32).at[dst].add(msg)
    return agg + skip


if __name__ == "__main__":
    key = jax.random.PRNGKey(0)
    k_param, k_x, k_src, k_dst, k_ea = jax.random.split(key, 5)

    N, c_in, c_out, edge_dim, E = 8, 16, 32, 8, 24

    params = init_params(k_param, c_in, c_out, edge_dim)
    node_feats = jax.random.normal(k_x, (N, c_in), jnp.float32)
    edge_index = jnp.stack([
        jax.random.randint(k_src, (E,), 0, N),   # row 0 = source
        jax.random.randint(k_dst, (E,), 0, N),   # row 1 = destination (PyG convention)
    ], axis=0)
    edge_attr = jax.random.normal(k_ea, (E, edge_dim), jnp.float32)

    # Small edge_chunk so the demo exercises the multi-chunk online-softmax path.
    out = transformerconv_forward(params, node_feats, edge_index, edge_attr,
                                  edge_dim, edge_chunk=16)
    jax.block_until_ready(out)
    assert out.shape == (N, c_out)
    ref = transformerconv_reference(params, node_feats, edge_index, edge_attr, edge_dim)
    err = float(jnp.max(jnp.abs(out - ref)))
    assert err < 1e-1, f"max abs error vs reference = {err}"

    # edge_attr=None path of the module (zeros substituted), default chunking.
    out_none = transformerconv_forward(params, node_feats, edge_index, None, edge_dim)
    jax.block_until_ready(out_none)
    ref_none = transformerconv_reference(params, node_feats, edge_index, None, edge_dim)
    err_none = float(jnp.max(jnp.abs(out_none - ref_none)))
    assert err_none < 1e-1, f"max abs error (edge_attr=None) = {err_none}"

    print("KERNEL_OK")
</pallas_src>

<mosaic_0001>
module attributes {stable_mosaic.version = 11 : i64} {
  func.func @_proj_kernel(%arg0: i32, %arg1: memref<128x128xbf16, #tpu.memory_space<vmem>>, %arg2: memref<128x512xbf16, #tpu.memory_space<vmem>>, %arg3: memref<1x512xf32, #tpu.memory_space<vmem>>, %arg4: memref<128x128xbf16, #tpu.memory_space<vmem>>, %arg5: memref<128x128xbf16, #tpu.memory_space<vmem>>, %arg6: memref<128x128xbf16, #tpu.memory_space<vmem>>, %arg7: memref<128x128xf32, #tpu.memory_space<vmem>>) attributes {dimension_semantics = [#tpu.dimension_semantics<parallel>], iteration_bounds = array<i64: 1>, scalar_prefetch = 0 : i64, scratch_operands = 0 : i64, tpu.core_type = #tpu.core_type<tc>, window_params = [{transform_indices = @transform_0, window_bounds = array<i64: 128, 128>}, {pipeline_mode = #tpu.pipeline_mode<synchronous>, transform_indices = @transform_1, window_bounds = array<i64: 128, 512>}, {pipeline_mode = #tpu.pipeline_mode<synchronous>, transform_indices = @transform_2, window_bounds = array<i64: 1, 512>}, {transform_indices = @transform_3, window_bounds = array<i64: 128, 128>}, {transform_indices = @transform_4, window_bounds = array<i64: 128, 128>}, {transform_indices = @transform_5, window_bounds = array<i64: 128, 128>}, {transform_indices = @transform_6, window_bounds = array<i64: 128, 128>}]} {
    %c0 = arith.constant 0 : index
    %c0_0 = arith.constant 0 : index
    %0 = vector.load %arg1[%c0, %c0_0] : memref<128x128xbf16, #tpu.memory_space<vmem>>, vector<128x128xbf16>
    %c0_1 = arith.constant 0 : index
    %c0_2 = arith.constant 0 : index
    %1 = vector.load %arg2[%c0_1, %c0_2] : memref<128x512xbf16, #tpu.memory_space<vmem>>, vector<128x512xbf16>
    %cst = arith.constant dense<0.000000e+00> : vector<128x512xf32>
    %2 = tpu.matmul %0, %1, %cst {dimension_numbers = #tpu.dot_dimension_numbers<[1], [0], [0], [1], [0, 0, 1, 1], [], []>} : vector<128x128xbf16>, vector<128x512xbf16>, vector<128x512xf32> -> vector<128x512xf32>
    %c0_3 = arith.constant 0 : index
    %c0_4 = arith.constant 0 : index
    %3 = vector.load %arg3[%c0_3, %c0_4] : memref<1x512xf32, #tpu.memory_space<vmem>>, vector<1x512xf32>
    %4 = vector.broadcast %3 : vector<1x512xf32> to vector<128x512xf32>
    %5 = arith.addf %2, %4 : vector<128x512xf32>
    %6 = vector.extract_strided_slice %5 {offsets = [0, 0], sizes = [128, 128], strides = [1, 1]} : vector<128x512xf32> to vector<128x128xf32>
    %7 = arith.truncf %6 : vector<128x128xf32> to vector<128x128xbf16>
    %c0_5 = arith.constant 0 : index
    %c0_6 = arith.constant 0 : index
    %8 = vector.load %arg4[%c0_5, %c0_6] : memref<128x128xbf16, #tpu.memory_space<vmem>>, vector<128x128xbf16>
    tpu.vector_store %arg4[%c0_5, %c0_6], %7 {strides = array<i32>} : memref<128x128xbf16, #tpu.memory_space<vmem>>, vector<128x128xbf16>,
    %9 = vector.extract_strided_slice %5 {offsets = [0, 128], sizes = [128, 128], strides = [1, 1]} : vector<128x512xf32> to vector<128x128xf32>
    %10 = arith.truncf %9 : vector<128x128xf32> to vector<128x128xbf16>
    %c0_7 = arith.constant 0 : index
    %c0_8 = arith.constant 0 : index
    %11 = vector.load %arg5[%c0_7, %c0_8] : memref<128x128xbf16, #tpu.memory_space<vmem>>, vector<128x128xbf16>
    tpu.vector_store %arg5[%c0_7, %c0_8], %10 {strides = array<i32>} : memref<128x128xbf16, #tpu.memory_space<vmem>>, vector<128x128xbf16>,
    %12 = vector.extract_strided_slice %5 {offsets = [0, 256], sizes = [128, 128], strides = [1, 1]} : vector<128x512xf32> to vector<128x128xf32>
    %13 = arith.truncf %12 : vector<128x128xf32> to vector<128x128xbf16>
    %c0_9 = arith.constant 0 : index
    %c0_10 = arith.constant 0 : index
    %14 = vector.load %arg6[%c0_9, %c0_10] : memref<128x128xbf16, #tpu.memory_space<vmem>>, vector<128x128xbf16>
    tpu.vector_store %arg6[%c0_9, %c0_10], %13 {strides = array<i32>} : memref<128x128xbf16, #tpu.memory_space<vmem>>, vector<128x128xbf16>,
    %15 = vector.extract_strided_slice %5 {offsets = [0, 384], sizes = [128, 128], strides = [1, 1]} : vector<128x512xf32> to vector<128x128xf32>
    %c0_11 = arith.constant 0 : index
    %c0_12 = arith.constant 0 : index
    %16 = vector.load %arg7[%c0_11, %c0_12] : memref<128x128xf32, #tpu.memory_space<vmem>>, vector<128x128xf32>
    tpu.vector_store %arg7[%c0_11, %c0_12], %15 {strides = array<i32>} : memref<128x128xf32, #tpu.memory_space<vmem>>, vector<128x128xf32>,
    return
  }
  func.func @transform_0(%arg0: i32) -> (i32, i32) {
    %c0_i32 = arith.constant 0 : i32
    %c0_i32_0 = arith.constant 0 : i32
    return %arg0, %c0_i32 : i32, i32
  }
  func.func @transform_1(%arg0: i32) -> (i32, i32) {
    %c0_i32 = arith.constant 0 : i32
    %c0_i32_0 = arith.constant 0 : i32
    %c0_i32_1 = arith.constant 0 : i32
    return %c0_i32, %c0_i32_0 : i32, i32
  }
  func.func @transform_2(%arg0: i32) -> (i32, i32) {
    %c0_i32 = arith.constant 0 : i32
    %c0_i32_0 = arith.constant 0 : i32
    %c0_i32_1 = arith.constant 0 : i32
    return %c0_i32, %c0_i32_0 : i32, i32
  }
  func.func @transform_3(%arg0: i32) -> (i32, i32) {
    %c0_i32 = arith.constant 0 : i32
    %c0_i32_0 = arith.constant 0 : i32
    return %arg0, %c0_i32 : i32, i32
  }
  func.func @transform_4(%arg0: i32) -> (i32, i32) {
    %c0_i32 = arith.constant 0 : i32
    %c0_i32_0 = arith.constant 0 : i32
    return %arg0, %c0_i32 : i32, i32
  }
  func.func @transform_5(%arg0: i32) -> (i32, i32) {
    %c0_i32 = arith.constant 0 : i32
    %c0_i32_0 = arith.constant 0 : i32
    return %arg0, %c0_i32 : i32, i32
  }
  func.func @transform_6(%arg0: i32) -> (i32, i32) {
    %c0_i32 = arith.constant 0 : i32
    %c0_i32_0 = arith.constant 0 : i32
    return %arg0, %c0_i32 : i32, i32
  }
}

</mosaic_0001>

<llo_original>
// kernel: tpu_custom_call.1
$region0: #{tpu_custom_call.1}
  #allocation0 [shape = 'u32[]', space=smem, size = 0x4, offset = 0x4, fixed_abs, tag = 'smem constant byte address 0x4 - core index']
  #allocation1 [shape = 'u32[72,128]{1,0:T(1,128)}', space=vmem, size = 0x9000, scoped, tag = 'internal scratch']
  %s0 = inlined_call_operand.hbm [shape: bf16[128,128], index: 0, kind: input, shape index: {}]
  %s1 = inlined_call_operand.hbm [shape: bf16[128,512], index: 1, kind: input, shape index: {}]
  %s2 = inlined_call_operand.hbm [shape: f32[1,512], index: 2, kind: input, shape index: {}]
  %s3 = inlined_call_operand.hbm [shape: bf16[128,128], index: 3, kind: output, shape index: {0}]
  %s4 = inlined_call_operand.hbm [shape: bf16[128,128], index: 4, kind: output, shape index: {1}]
  %s5 = inlined_call_operand.hbm [shape: bf16[128,128], index: 5, kind: output, shape index: {2}]
  %s6 = inlined_call_operand.hbm [shape: f32[128,128], index: 6, kind: output, shape index: {3}]
  %7 = xla_tuple %s3, %s4, %s5, %s6
  %s8 = sld [smem:[#allocation0]]
  $region58: #{tpu_custom_call.1} parent=0
    _
  %s10 = ssub.s32 1, %s8
  %s11 = scalar_select 0, %s10, %s8
  $region1: #{tpu_custom_call.1} parent=0
    #allocation2 [shape = 'u8[32768]{0}', space=vmem, size = 0x8000, scoped, tag = 'input window, operand 0, single buffered']
    #allocation3 [shape = 's32[1]{0}', space=sflag, size = 0x4, scoped, tag = 'scoped memory for tpu_custom_call.1']
    #allocation4 [shape = 's32[1]{0}', space=sflag, size = 0x4, scoped, tag = 'scoped memory for tpu_custom_call.1']
    #allocation5 [shape = 'u8[131072]{0}', space=vmem, size = 0x20000, scoped, tag = 'input window, operand 1, single buffered']
    #allocation6 [shape = 's32[1]{0}', space=sflag, size = 0x4, scoped, tag = 'scoped memory for tpu_custom_call.1']
    #allocation7 [shape = 'u8[2048]{0}', space=vmem, size = 0x800, scoped, tag = 'input window, operand 2, single buffered']
    #allocation8 [shape = 'u8[32768]{0}', space=vmem, size = 0x8000, scoped, tag = 'output window, operand 0, single buffered']
    #allocation9 [shape = 'u8[32768]{0}', space=vmem, size = 0x8000, scoped, tag = 'output window, operand 1, single buffered']
    #allocation10 [shape = 's32[1]{0}', space=sflag, size = 0x4, scoped, tag = 'scoped memory for tpu_custom_call.1']
    #allocation11 [shape = 'u8[32768]{0}', space=vmem, size = 0x8000, scoped, tag = 'output window, operand 2, single buffered']
    #allocation12 [shape = 'u8[65536]{0}', space=vmem, size = 0x10000, scoped, tag = 'output window, operand 3, single buffered']
    #allocation13 [shape = 's32[1]{0}', space=sflag, size = 0x4, scoped, tag = 'scoped memory for tpu_custom_call.1']
    %12 = vsyncpa [#allocation3], 0
    %13 = vsyncpa [#allocation6], 0
    %14 = vsyncpa [#allocation4], 0
    %15 = vsyncpa [#allocation10], 0
    %16 = vsyncpa [#allocation13], 0
    // Predicated region
    $region2: #{tpu_custom_call.1} parent=1 // pred_check
      _
    $region3: #{tpu_custom_call.1} parent=1 // pred_check_branch
      %18 = sbr.rel (0) target = $region5
    $region4: #{tpu_custom_call.1} parent=1 // pred_region
      %20 = vsyncadd [#allocation3], 0
      %s21 = sshll.u32 %s0, 4
      %s22 = int_to_ptr.hbm [resolvable:$true] %s21
      %s23 = sshll.u32 [#allocation2], 4
      %s24 = int_to_ptr.vmem [resolvable:$true] %s23
      %29 = dma.hbm_to_vmem [thread:$0]  %s22, 1024, %s24, [#allocation3], 64, 64, 4
    $region5: #{tpu_custom_call.1} parent=1 // pred_fallthru
      _
    // Predicated region
    $region6: #{tpu_custom_call.1} parent=1 // pred_check
      _
    $region7: #{tpu_custom_call.1} parent=1 // pred_check_branch
      %31 = sbr.rel (0) target = $region9
    $region8: #{tpu_custom_call.1} parent=1 // pred_region
      %33 = vsyncadd [#allocation6], 0
      %s34 = sshll.u32 %s1, 4
      %s35 = int_to_ptr.hbm [resolvable:$true] %s34
      %s36 = sshll.u32 [#allocation5], 4
      %s37 = int_to_ptr.vmem [resolvable:$true] %s36
      %42 = dma.hbm_to_vmem [thread:$0]  %s35, 4096, %s37, [#allocation6], 256, 256, 16
    $region9: #{tpu_custom_call.1} parent=1 // pred_fallthru
      _
    // Predicated region
    $region10: #{tpu_custom_call.1} parent=1 // pred_check
      _
    $region11: #{tpu_custom_call.1} parent=1 // pred_check_branch
      %44 = sbr.rel (0) target = $region13
    $region12: #{tpu_custom_call.1} parent=1 // pred_region
      %46 = vsyncadd [#allocation6], 0
      %s48 = sshll.u32 %s2, 4
      %s49 = int_to_ptr.hbm [resolvable:$true] %s48
      %s50 = sshll.u32 [#allocation7], 4
      %s51 = int_to_ptr.vmem [resolvable:$true] %s50
      %53 = dma.hbm_to_vmem [thread:$0]  %s49, 64, %s51, [#allocation6]
    $region13: #{tpu_custom_call.1} parent=1 // pred_fallthru
      _
    // Predicated region
    $region14: #{tpu_custom_call.1} parent=1 // pred_check
      _
    $region15: #{tpu_custom_call.1} parent=1 // pred_check_branch
      %55 = sbr.rel (0) target = $region17
    $region16: #{tpu_custom_call.1} parent=1 // pred_region
      %57 = dma.done [#allocation3], 1024
    $region17: #{tpu_custom_call.1} parent=1 // pred_fallthru
      _
    // Predicated region
    $region18: #{tpu_custom_call.1} parent=1 // pred_check
      _
    $region19: #{tpu_custom_call.1} parent=1 // pred_check_branch
      %59 = sbr.rel (0) target = $region21
    $region20: #{tpu_custom_call.1} parent=1 // pred_region
      %61 = dma.done [#allocation6], 4096
    $region21: #{tpu_custom_call.1} parent=1 // pred_fallthru
      _
    // Predicated region
    $region22: #{tpu_custom_call.1} parent=1 // pred_check
      _
    $region23: #{tpu_custom_call.1} parent=1 // pred_check_branch
      %63 = sbr.rel (0) target = $region25
    $region24: #{tpu_custom_call.1} parent=1 // pred_region
      %65 = dma.done [#allocation6], 64
    $region25: #{tpu_custom_call.1} parent=1 // pred_fallthru
      _
    %v66 = vld [vmem:[#allocation2] sm:$0xf]
    %v67 = vld [vmem:[#allocation2 + $0x4] sm:$0xf]
    %v68 = vld [vmem:[#allocation2 + $0x8] sm:$0xf]
    %v69 = vld [vmem:[#allocation2 + $0xc] sm:$0xf]
    %v70 = vld [vmem:[#allocation2 + $0x10] sm:$0xf]
    %v71 = vld [vmem:[#allocation2 + $0x14] sm:$0xf]
    %v72 = vld [vmem:[#allocation2 + $0x18] sm:$0xf]
    %v73 = vld [vmem:[#allocation2 + $0x1c] sm:$0xf]
    %v74 = vld [vmem:[#allocation2 + $0x20] sm:$0xf]
    %v75 = vld [vmem:[#allocation2 + $0x24] sm:$0xf]
    %v76 = vld [vmem:[#allocation2 + $0x28] sm:$0xf]
    %v77 = vld [vmem:[#allocation2 + $0x2c] sm:$0xf]
    %v78 = vld [vmem:[#allocation2 + $0x30] sm:$0xf]
    %v79 = vld [vmem:[#allocation2 + $0x34] sm:$0xf]
    %v80 = vld [vmem:[#allocation2 + $0x38] sm:$0xf]
    %v81 = vld [vmem:[#allocation2 + $0x3c] sm:$0xf]
    %v82 = vld [vmem:[#allocation5] sm:$0xff]
    %v83 = vld [vmem:[#allocation5 + $0x8] sm:$0xff]
    %v84 = vld [vmem:[#allocation5 + $0x10] sm:$0xff]
    %v85 = vld [vmem:[#allocation5 + $0x18] sm:$0xff]
    %v86 = vld [vmem:[#allocation5 + $0x20] sm:$0xff]
    %v87 = vld [vmem:[#allocation5 + $0x28] sm:$0xff]
    %v88 = vld [vmem:[#allocation5 + $0x30] sm:$0xff]
    %v89 = vld [vmem:[#allocation5 + $0x38] sm:$0xff]
    %v90 = vld [vmem:[#allocation5 + $0x40] sm:$0xff]
    %v91 = vld [vmem:[#allocation5 + $0x48] sm:$0xff]
    %v92 = vld [vmem:[#allocation5 + $0x50] sm:$0xff]
    %v93 = vld [vmem:[#allocation5 + $0x58] sm:$0xff]
    %v94 = vld [vmem:[#allocation5 + $0x60] sm:$0xff]
    %v95 = vld [vmem:[#allocation5 + $0x68] sm:$0xff]
    %v96 = vld [vmem:[#allocation5 + $0x70] sm:$0xff]
    %v97 = vld [vmem:[#allocation5 + $0x78] sm:$0xff]
    %v98 = vld [vmem:[#allocation5 + $0x80] sm:$0xff]
    %v99 = vld [vmem:[#allocation5 + $0x88] sm:$0xff]
    %v100 = vld [vmem:[#allocation5 + $0x90] sm:$0xff]
    %v101 = vld [vmem:[#allocation5 + $0x98] sm:$0xff]
    %v102 = vld [vmem:[#allocation5 + $0xa0] sm:$0xff]
    %v103 = vld [vmem:[#allocation5 + $0xa8] sm:$0xff]
    %v104 = vld [vmem:[#allocation5 + $0xb0] sm:$0xff]
    %v105 = vld [vmem:[#allocation5 + $0xb8] sm:$0xff]
    %v106 = vld [vmem:[#allocation5 + $0xc0] sm:$0xff]
    %v107 = vld [vmem:[#allocation5 + $0xc8] sm:$0xff]
    %v108 = vld [vmem:[#allocation5 + $0xd0] sm:$0xff]
    %v109 = vld [vmem:[#allocation5 + $0xd8] sm:$0xff]
    %v110 = vld [vmem:[#allocation5 + $0xe0] sm:$0xff]
    %v111 = vld [vmem:[#allocation5 + $0xe8] sm:$0xff]
    %v112 = vld [vmem:[#allocation5 + $0xf0] sm:$0xff]
    %v113 = vld [vmem:[#allocation5 + $0xf8] sm:$0xff]
    %v114 = vld [vmem:[#allocation7] sm:$0xf]
    %v116 = vperm.slane %v114, 0
    %v117 = vperm.slane %v114, 1
    %v118 = vperm.slane %v114, 2
    %v119 = vperm.slane %v114, 3
    %v140 = vunpack.c.l.b16 %v66
    %v141 = vunpack.c.l.b16 %v67
    %v142 = vunpack.c.l.b16 %v68
    %v143 = vunpack.c.l.b16 %v69
    %v144 = vunpack.c.l.b16 %v70
    %v145 = vunpack.c.l.b16 %v71
    %v146 = vunpack.c.l.b16 %v72
    %v147 = vunpack.c.l.b16 %v73
    %v148 = vunpack.c.l.b16 %v74
    %v149 = vunpack.c.l.b16 %v75
    %v150 = vunpack.c.l.b16 %v76
    %v151 = vunpack.c.l.b16 %v77
    %v152 = vunpack.c.l.b16 %v78
    %v153 = vunpack.c.l.b16 %v79
    %v154 = vunpack.c.l.b16 %v80
    %v155 = vunpack.c.l.b16 %v81
    %v156 = vpack.c.b16 %v141, %v140
    %v157 = vpack.c.b16 %v143, %v142
    %v158 = vpack.c.b16 %v145, %v144
    %v159 = vpack.c.b16 %v147, %v146
    %v160 = vpack.c.b16 %v149, %v148
    %v161 = vpack.c.b16 %v151, %v150
    %v162 = vpack.c.b16 %v153, %v152
    %v163 = vpack.c.b16 %v155, %v154
    %v204 = vunpack.c.l.b16 %v82
    %v205 = vunpack.c.h.b16 %v82
    %v206 = vunpack.c.l.b16 %v83
    %v207 = vunpack.c.h.b16 %v83
    %v208 = vunpack.c.l.b16 %v84
    %v209 = vunpack.c.h.b16 %v84
    %v210 = vunpack.c.l.b16 %v85
    %v211 = vunpack.c.h.b16 %v85
    %v212 = vunpack.c.l.b16 %v86
    %v213 = vunpack.c.h.b16 %v86
    %v214 = vunpack.c.l.b16 %v87
    %v215 = vunpack.c.h.b16 %v87
    %v216 = vunpack.c.l.b16 %v88
    %v217 = vunpack.c.h.b16 %v88
    %v218 = vunpack.c.l.b16 %v89
    %v219 = vunpack.c.h.b16 %v89
    %v220 = vunpack.c.l.b16 %v90
    %v221 = vunpack.c.h.b16 %v90
    %v222 = vunpack.c.l.b16 %v91
    %v223 = vunpack.c.h.b16 %v91
    %v224 = vunpack.c.l.b16 %v92
    %v225 = vunpack.c.h.b16 %v92
    %v226 = vunpack.c.l.b16 %v93
    %v227 = vunpack.c.h.b16 %v93
    %v228 = vunpack.c.l.b16 %v94
    %v229 = vunpack.c.h.b16 %v94
    %v230 = vunpack.c.l.b16 %v95
    %v231 = vunpack.c.h.b16 %v95
    %v232 = vunpack.c.l.b16 %v96
    %v233 = vunpack.c.h.b16 %v96
    %v234 = vunpack.c.l.b16 %v97
    %v235 = vunpack.c.h.b16 %v97
    %v236 = vunpack.c.l.b16 %v98
    %v237 = vunpack.c.h.b16 %v98
    %v238 = vunpack.c.l.b16 %v99
    %v239 = vunpack.c.h.b16 %v99
    %v240 = vunpack.c.l.b16 %v100
    %v241 = vunpack.c.h.b16 %v100
    %v242 = vunpack.c.l.b16 %v101
    %v243 = vunpack.c.h.b16 %v101
    %v244 = vunpack.c.l.b16 %v102
    %v245 = vunpack.c.h.b16 %v102
    %v246 = vunpack.c.l.b16 %v103
    %v247 = vunpack.c.h.b16 %v103
    %v248 = vunpack.c.l.b16 %v104
    %v249 = vunpack.c.h.b16 %v104
    %v250 = vunpack.c.l.b16 %v105
    %v251 = vunpack.c.h.b16 %v105
    %v252 = vunpack.c.l.b16 %v106
    %v253 = vunpack.c.h.b16 %v106
    %v254 = vunpack.c.l.b16 %v107
    %v255 = vunpack.c.h.b16 %v107
    %v256 = vunpack.c.l.b16 %v108
    %v257 = vunpack.c.h.b16 %v108
    %v258 = vunpack.c.l.b16 %v109
    %v259 = vunpack.c.h.b16 %v109
    %v260 = vunpack.c.l.b16 %v110
    %v261 = vunpack.c.h.b16 %v110
    %v262 = vunpack.c.l.b16 %v111
    %v263 = vunpack.c.h.b16 %v111
    %v264 = vunpack.c.l.b16 %v112
    %v265 = vunpack.c.h.b16 %v112
    %v266 = vunpack.c.l.b16 %v113
    %v267 = vunpack.c.h.b16 %v113
    %v268 = vpack.c.b16 %v208, %v204
    %v269 = vpack.c.b16 %v209, %v205
    %v270 = vpack.c.b16 %v210, %v206
    %v271 = vpack.c.b16 %v211, %v207
    %v272 = vpack.c.b16 %v216, %v212
    %v273 = vpack.c.b16 %v217, %v213
    %v274 = vpack.c.b16 %v218, %v214
    %v275 = vpack.c.b16 %v219, %v215
    %v276 = vpack.c.b16 %v224, %v220
    %v277 = vpack.c.b16 %v225, %v221
    %v278 = vpack.c.b16 %v226, %v222
    %v279 = vpack.c.b16 %v227, %v223
    %v280 = vpack.c.b16 %v232, %v228
    %v281 = vpack.c.b16 %v233, %v229
    %v282 = vpack.c.b16 %v234, %v230
    %v283 = vpack.c.b16 %v235, %v231
    %v284 = vpack.c.b16 %v240, %v236
    %v285 = vpack.c.b16 %v241, %v237
    %v286 = vpack.c.b16 %v242, %v238
    %v287 = vpack.c.b16 %v243, %v239
    %v288 = vpack.c.b16 %v248, %v244
    %v289 = vpack.c.b16 %v249, %v245
    %v290 = vpack.c.b16 %v250, %v246
    %v291 = vpack.c.b16 %v251, %v247
    %v292 = vpack.c.b16 %v256, %v252
    %v293 = vpack.c.b16 %v257, %v253
    %v294 = vpack.c.b16 %v258, %v254
    %v295 = vpack.c.b16 %v259, %v255
    %v296 = vpack.c.b16 %v264, %v260
    %v297 = vpack.c.b16 %v265, %v261
    %v298 = vpack.c.b16 %v266, %v262
    %v299 = vpack.c.b16 %v267, %v263
    %332 = vmatpush.bf16.msra.mxu0 %v296
    %333 = vmatpush.bf16.msra.mxu0 %v292
    %334 = vmatpush.bf16.msra.mxu0 %v288
    %335 = vmatpush.bf16.msra.mxu0 %v284
    %336 = vmatpush.bf16.msra.mxu0 %v280
    %337 = vmatpush.bf16.msra.mxu0 %v276
    %338 = vmatpush.bf16.msra.mxu0 %v272
    %339 = vmatpush.bf16.msra.mxu0 %v268
    %340 = vmatmul.bf16.gmra.mxu0 %v156
    %v341 = vpop.f32.mrf.mxu0
    %v342 = vadd.f32 %v116, %v341
    %v343 = vpop.f32.mrf.mxu0
    %v344 = vadd.f32 %v116, %v343
    %345 = vmatmul.bf16.gmra.mxu0 %v157
    %v346 = vpop.f32.mrf.mxu0
    %v347 = vadd.f32 %v116, %v346
    %v348 = vpop.f32.mrf.mxu0
    %v349 = vadd.f32 %v116, %v348
    %350 = vmatmul.bf16.gmra.mxu0 %v158
    %v351 = vpop.f32.mrf.mxu0
    %v352 = vadd.f32 %v116, %v351
    %v353 = vpop.f32.mrf.mxu0
    %v354 = vadd.f32 %v116, %v353
    %355 = vmatmul.bf16.gmra.mxu0 %v159
    %v356 = vpop.f32.mrf.mxu0
    %v357 = vadd.f32 %v116, %v356
    %v358 = vpop.f32.mrf.mxu0
    %v359 = vadd.f32 %v116, %v358
    %360 = vmatmul.bf16.gmra.mxu0 %v160
    %v361 = vpop.f32.mrf.mxu0
    %v362 = vadd.f32 %v116, %v361
    %v363 = vpop.f32.mrf.mxu0
    %v364 = vadd.f32 %v116, %v363
    %365 = vmatmul.bf16.gmra.mxu0 %v161
    %v366 = vpop.f32.mrf.mxu0
    %v367 = vadd.f32 %v116, %v366
    %v368 = vpop.f32.mrf.mxu0
    %v369 = vadd.f32 %v116, %v368
    %370 = vmatmul.bf16.gmra.mxu0 %v162
    %v371 = vpop.f32.mrf.mxu0
    %v372 = vadd.f32 %v116, %v371
    %v373 = vpop.f32.mrf.mxu0
    %v374 = vadd.f32 %v116, %v373
    %375 = vmatmul.bf16.gmra.mxu0 %v163
    %v376 = vpop.f32.mrf.mxu0
    %v377 = vadd.f32 %v116, %v376
    %v378 = vpop.f32.mrf.mxu0
    %v379 = vadd.f32 %v116, %v378
    %380 = vdwg.mxu0
    %381 = vmatpush.bf16.msra.mxu0 %v297
    %382 = vmatpush.bf16.msra.mxu0 %v293
    %383 = vmatpush.bf16.msra.mxu0 %v289
    %384 = vmatpush.bf16.msra.mxu0 %v285
    %385 = vmatpush.bf16.msra.mxu0 %v281
    %386 = vmatpush.bf16.msra.mxu0 %v277
    %387 = vmatpush.bf16.msra.mxu0 %v273
    %388 = vmatpush.bf16.msra.mxu0 %v269
    %389 = vmatmul.bf16.gmra.mxu0 %v156
    %v390 = vpop.f32.mrf.mxu0
    %v391 = vadd.f32 %v117, %v390
    %v392 = vpop.f32.mrf.mxu0
    %v393 = vadd.f32 %v117, %v392
    %394 = vmatmul.bf16.gmra.mxu0 %v157
    %v395 = vpop.f32.mrf.mxu0
    %v396 = vadd.f32 %v117, %v395
    %v397 = vpop.f32.mrf.mxu0
    %v398 = vadd.f32 %v117, %v397
    %399 = vmatmul.bf16.gmra.mxu0 %v158
    %v400 = vpop.f32.mrf.mxu0
    %v401 = vadd.f32 %v117, %v400
    %v402 = vpop.f32.mrf.mxu0
    %v403 = vadd.f32 %v117, %v402
    %404 = vmatmul.bf16.gmra.mxu0 %v159
    %v405 = vpop.f32.mrf.mxu0
    %v406 = vadd.f32 %v117, %v405
    %v407 = vpop.f32.mrf.mxu0
    %v408 = vadd.f32 %v117, %v407
    %409 = vmatmul.bf16.gmra.mxu0 %v160
    %v410 = vpop.f32.mrf.mxu0
    %v411 = vadd.f32 %v117, %v410
    %v412 = vpop.f32.mrf.mxu0
    %v413 = vadd.f32 %v117, %v412
    %414 = vmatmul.bf16.gmra.mxu0 %v161
    %v415 = vpop.f32.mrf.mxu0
    %v416 = vadd.f32 %v117, %v415
    %v417 = vpop.f32.mrf.mxu0
    %v418 = vadd.f32 %v117, %v417
    %419 = vmatmul.bf16.gmra.mxu0 %v162
    %v420 = vpop.f32.mrf.mxu0
    %v421 = vadd.f32 %v117, %v420
    %v422 = vpop.f32.mrf.mxu0
    %v423 = vadd.f32 %v117, %v422
    %424 = vmatmul.bf16.gmra.mxu0 %v163
    %v425 = vpop.f32.mrf.mxu0
    %v426 = vadd.f32 %v117, %v425
    %v427 = vpop.f32.mrf.mxu0
    %v428 = vadd.f32 %v117, %v427
    %429 = vdwg.mxu0
    %430 = vmatpush.bf16.msra.mxu0 %v298
    %431 = vmatpush.bf16.msra.mxu0 %v294
    %432 = vmatpush.bf16.msra.mxu0 %v290
    %433 = vmatpush.bf16.msra.mxu0 %v286
    %434 = vmatpush.bf16.msra.mxu0 %v282
    %435 = vmatpush.bf16.msra.mxu0 %v278
    %436 = vmatpush.bf16.msra.mxu0 %v274
    %437 = vmatpush.bf16.msra.mxu0 %v270
    %438 = vmatmul.bf16.gmra.mxu0 %v156
    %v439 = vpop.f32.mrf.mxu0
    %v440 = vadd.f32 %v118, %v439
    %v441 = vpop.f32.mrf.mxu0
    %v442 = vadd.f32 %v118, %v441
    %443 = vmatmul.bf16.gmra.mxu0 %v157
    %v444 = vpop.f32.mrf.mxu0
    %v445 = vadd.f32 %v118, %v444
    %v446 = vpop.f32.mrf.mxu0
    %v447 = vadd.f32 %v118, %v446
    %448 = vmatmul.bf16.gmra.mxu0 %v158
    %v449 = vpop.f32.mrf.mxu0
    %v450 = vadd.f32 %v118, %v449
    %v451 = vpop.f32.mrf.mxu0
    %v452 = vadd.f32 %v118, %v451
    %453 = vmatmul.bf16.gmra.mxu0 %v159
    %v454 = vpop.f32.mrf.mxu0
    %v455 = vadd.f32 %v118, %v454
    %v456 = vpop.f32.mrf.mxu0
    %v457 = vadd.f32 %v118, %v456
    %458 = vmatmul.bf16.gmra.mxu0 %v160
    %v459 = vpop.f32.mrf.mxu0
    %v460 = vadd.f32 %v118, %v459
    %v461 = vpop.f32.mrf.mxu0
    %v462 = vadd.f32 %v118, %v461
    %463 = vmatmul.bf16.gmra.mxu0 %v161
    %v464 = vpop.f32.mrf.mxu0
    %v465 = vadd.f32 %v118, %v464
    %v466 = vpop.f32.mrf.mxu0
    %v467 = vadd.f32 %v118, %v466
    %468 = vmatmul.bf16.gmra.mxu0 %v162
    %v469 = vpop.f32.mrf.mxu0
    %v470 = vadd.f32 %v118, %v469
    %v471 = vpop.f32.mrf.mxu0
    %v472 = vadd.f32 %v118, %v471
    %473 = vmatmul.bf16.gmra.mxu0 %v163
    %v474 = vpop.f32.mrf.mxu0
    %v475 = vadd.f32 %v118, %v474
    %v476 = vpop.f32.mrf.mxu0
    %v477 = vadd.f32 %v118, %v476
    %478 = vdwg.mxu0
    %479 = vmatpush.bf16.msra.mxu0 %v299
    %480 = vmatpush.bf16.msra.mxu0 %v295
    %481 = vmatpush.bf16.msra.mxu0 %v291
    %482 = vmatpush.bf16.msra.mxu0 %v287
    %483 = vmatpush.bf16.msra.mxu0 %v283
    %484 = vmatpush.bf16.msra.mxu0 %v279
    %485 = vmatpush.bf16.msra.mxu0 %v275
    %486 = vmatpush.bf16.msra.mxu0 %v271
    %487 = vmatmul.bf16.gmra.mxu0 %v156
    %v488 = vpop.f32.mrf.mxu0
    %v489 = vadd.f32 %v119, %v488
    %v490 = vpop.f32.mrf.mxu0
    %v491 = vadd.f32 %v119, %v490
    %492 = vmatmul.bf16.gmra.mxu0 %v157
    %v493 = vpop.f32.mrf.mxu0
    %v494 = vadd.f32 %v119, %v493
    %v495 = vpop.f32.mrf.mxu0
    %v496 = vadd.f32 %v119, %v495
    %497 = vmatmul.bf16.gmra.mxu0 %v158
    %v498 = vpop.f32.mrf.mxu0
    %v499 = vadd.f32 %v119, %v498
    %v500 = vpop.f32.mrf.mxu0
    %v501 = vadd.f32 %v119, %v500
    %502 = vmatmul.bf16.gmra.mxu0 %v159
    %v503 = vpop.f32.mrf.mxu0
    %v504 = vadd.f32 %v119, %v503
    %v505 = vpop.f32.mrf.mxu0
    %v506 = vadd.f32 %v119, %v505
    %507 = vmatmul.bf16.gmra.mxu0 %v160
    %v508 = vpop.f32.mrf.mxu0
    %v509 = vadd.f32 %v119, %v508
    %v510 = vpop.f32.mrf.mxu0
    %v511 = vadd.f32 %v119, %v510
    %512 = vmatmul.bf16.gmra.mxu0 %v161
    %v513 = vpop.f32.mrf.mxu0
    %v514 = vadd.f32 %v119, %v513
    %v515 = vpop.f32.mrf.mxu0
    %v516 = vadd.f32 %v119, %v515
    %517 = vmatmul.bf16.gmra.mxu0 %v162
    %v518 = vpop.f32.mrf.mxu0
    %v519 = vadd.f32 %v119, %v518
    %v520 = vpop.f32.mrf.mxu0
    %v521 = vadd.f32 %v119, %v520
    %522 = vmatmul.bf16.gmra.mxu0 %v163
    %v523 = vpop.f32.mrf.mxu0
    %v524 = vadd.f32 %v119, %v523
    %v525 = vpop.f32.mrf.mxu0
    %v526 = vadd.f32 %v119, %v525
    %527 = vdwg.mxu0
    %v528 = vpack.c.bf16 %v342, %v342
    %v529 = vpack.c.bf16 %v344, %v344
    %v530 = vpack.c.bf16 %v347, %v347
    %v531 = vpack.c.bf16 %v349, %v349
    %v532 = vpack.c.bf16 %v352, %v352
    %v533 = vpack.c.bf16 %v354, %v354
    %v534 = vpack.c.bf16 %v357, %v357
    %v535 = vpack.c.bf16 %v359, %v359
    %v536 = vpack.c.bf16 %v362, %v362
    %v537 = vpack.c.bf16 %v364, %v364
    %v538 = vpack.c.bf16 %v367, %v367
    %v539 = vpack.c.bf16 %v369, %v369
    %v540 = vpack.c.bf16 %v372, %v372
    %v541 = vpack.c.bf16 %v374, %v374
    %v542 = vpack.c.bf16 %v377, %v377
    %v543 = vpack.c.bf16 %v379, %v379
    %544 = vst [vmem:[#allocation8] sm:$0xf] %v528
    %545 = vst [vmem:[#allocation8 + $0x4] sm:$0xf] %v529
    %546 = vst [vmem:[#allocation8 + $0x8] sm:$0xf] %v530
    %547 = vst [vmem:[#allocation8 + $0xc] sm:$0xf] %v531
    %548 = vst [vmem:[#allocation8 + $0x10] sm:$0xf] %v532
    %549 = vst [vmem:[#allocation8 + $0x14] sm:$0xf] %v533
    %550 = vst [vmem:[#allocation8 + $0x18] sm:$0xf] %v534
    %551 = vst [vmem:[#allocation8 + $0x1c] sm:$0xf] %v535
    %552 = vst [vmem:[#allocation8 + $0x20] sm:$0xf] %v536
    %553 = vst [vmem:[#allocation8 + $0x24] sm:$0xf] %v537
    %554 = vst [vmem:[#allocation8 + $0x28] sm:$0xf] %v538
    %555 = vst [vmem:[#allocation8 + $0x2c] sm:$0xf] %v539
    %556 = vst [vmem:[#allocation8 + $0x30] sm:$0xf] %v540
    %557 = vst [vmem:[#allocation8 + $0x34] sm:$0xf] %v541
    %558 = vst [vmem:[#allocation8 + $0x38] sm:$0xf] %v542
    %559 = vst [vmem:[#allocation8 + $0x3c] sm:$0xf] %v543
    %v560 = vpack.c.bf16 %v391, %v391
    %v561 = vpack.c.bf16 %v393, %v393
    %v562 = vpack.c.bf16 %v396, %v396
    %v563 = vpack.c.bf16 %v398, %v398
    %v564 = vpack.c.bf16 %v401, %v401
    %v565 = vpack.c.bf16 %v403, %v403
    %v566 = vpack.c.bf16 %v406, %v406
    %v567 = vpack.c.bf16 %v408, %v408
    %v568 = vpack.c.bf16 %v411, %v411
    %v569 = vpack.c.bf16 %v413, %v413
    %v570 = vpack.c.bf16 %v416, %v416
    %v571 = vpack.c.bf16 %v418, %v418
    %v572 = vpack.c.bf16 %v421, %v421
    %v573 = vpack.c.bf16 %v423, %v423
    %v574 = vpack.c.bf16 %v426, %v426
    %v575 = vpack.c.bf16 %v428, %v428
    %576 = vst [vmem:[#allocation9] sm:$0xf] %v560
    %577 = vst [vmem:[#allocation9 + $0x4] sm:$0xf] %v561
    %578 = vst [vmem:[#allocation9 + $0x8] sm:$0xf] %v562
    %579 = vst [vmem:[#allocation9 + $0xc] sm:$0xf] %v563
    %580 = vst [vmem:[#allocation9 + $0x10] sm:$0xf] %v564
    %581 = vst [vmem:[#allocation9 + $0x14] sm:$0xf] %v565
    %582 = vst [vmem:[#allocation9 + $0x18] sm:$0xf] %v566
    %583 = vst [vmem:[#allocation9 + $0x1c] sm:$0xf] %v567
    %584 = vst [vmem:[#allocation9 + $0x20] sm:$0xf] %v568
    %585 = vst [vmem:[#allocation9 + $0x24] sm:$0xf] %v569
    %586 = vst [vmem:[#allocation9 + $0x28] sm:$0xf] %v570
    %587 = vst [vmem:[#allocation9 + $0x2c] sm:$0xf] %v571
    %588 = vst [vmem:[#allocation9 + $0x30] sm:$0xf] %v572
    %589 = vst [vmem:[#allocation9 + $0x34] sm:$0xf] %v573
    %590 = vst [vmem:[#allocation9 + $0x38] sm:$0xf] %v574
    %591 = vst [vmem:[#allocation9 + $0x3c] sm:$0xf] %v575
    %v592 = vpack.c.bf16 %v440, %v440
    %v593 = vpack.c.bf16 %v442, %v442
    %v594 = vpack.c.bf16 %v445, %v445
    %v595 = vpack.c.bf16 %v447, %v447
    %v596 = vpack.c.bf16 %v450, %v450
    %v597 = vpack.c.bf16 %v452, %v452
    %v598 = vpack.c.bf16 %v455, %v455
    %v599 = vpack.c.bf16 %v457, %v457
    %v600 = vpack.c.bf16 %v460, %v460
    %v601 = vpack.c.bf16 %v462, %v462
    %v602 = vpack.c.bf16 %v465, %v465
    %v603 = vpack.c.bf16 %v467, %v467
    %v604 = vpack.c.bf16 %v470, %v470
    %v605 = vpack.c.bf16 %v472, %v472
    %v606 = vpack.c.bf16 %v475, %v475
    %v607 = vpack.c.bf16 %v477, %v477
    %608 = vst [vmem:[#allocation11] sm:$0xf] %v592
    %609 = vst [vmem:[#allocation11 + $0x4] sm:$0xf] %v593
    %610 = vst [vmem:[#allocation11 + $0x8] sm:$0xf] %v594
    %611 = vst [vmem:[#allocation11 + $0xc] sm:$0xf] %v595
    %612 = vst [vmem:[#allocation11 + $0x10] sm:$0xf] %v596
    %613 = vst [vmem:[#allocation11 + $0x14] sm:$0xf] %v597
    %614 = vst [vmem:[#allocation11 + $0x18] sm:$0xf] %v598
    %615 = vst [vmem:[#allocation11 + $0x1c] sm:$0xf] %v599
    %616 = vst [vmem:[#allocation11 + $0x20] sm:$0xf] %v600
    %617 = vst [vmem:[#allocation11 + $0x24] sm:$0xf] %v601
    %618 = vst [vmem:[#allocation11 + $0x28] sm:$0xf] %v602
    %619 = vst [vmem:[#allocation11 + $0x2c] sm:$0xf] %v603
    %620 = vst [vmem:[#allocation11 + $0x30] sm:$0xf] %v604
    %621 = vst [vmem:[#allocation11 + $0x34] sm:$0xf] %v605
    %622 = vst [vmem:[#allocation11 + $0x38] sm:$0xf] %v606
    %623 = vst [vmem:[#allocation11 + $0x3c] sm:$0xf] %v607
    %624 = vst [vmem:[#allocation12] sm:$0xff] %v489
    %625 = vst [vmem:[#allocation12 + $0x8] sm:$0xff] %v491
    %626 = vst [vmem:[#allocation12 + $0x10] sm:$0xff] %v494
    %627 = vst [vmem:[#allocation12 + $0x18] sm:$0xff] %v496
    %628 = vst [vmem:[#allocation12 + $0x20] sm:$0xff] %v499
    %629 = vst [vmem:[#allocation12 + $0x28] sm:$0xff] %v501
    %630 = vst [vmem:[#allocation12 + $0x30] sm:$0xff] %v504
    %631 = vst [vmem:[#allocation12 + $0x38] sm:$0xff] %v506
    %632 = vst [vmem:[#allocation12 + $0x40] sm:$0xff] %v509
    %633 = vst [vmem:[#allocation12 + $0x48] sm:$0xff] %v511
    %634 = vst [vmem:[#allocation12 + $0x50] sm:$0xff] %v514
    %635 = vst [vmem:[#allocation12 + $0x58] sm:$0xff] %v516
    %636 = vst [vmem:[#allocation12 + $0x60] sm:$0xff] %v519
    %637 = vst [vmem:[#allocation12 + $0x68] sm:$0xff] %v521
    %638 = vst [vmem:[#allocation12 + $0x70] sm:$0xff] %v524
    %639 = vst [vmem:[#allocation12 + $0x78] sm:$0xff] %v526
    // Predicated region
    $region26: #{tpu_custom_call.1} parent=1 // pred_check
      _
    $region27: #{tpu_custom_call.1} parent=1 // pred_check_branch
      %641 = sbr.rel (0) target = $region29
    $region28: #{tpu_custom_call.1} parent=1 // pred_region
      %643 = vsyncadd [#allocation4], 0
      %s644 = sshll.u32 [#allocation8], 4
      %s645 = int_to_ptr.vmem [resolvable:$true] %s644
      %s646 = sshll.u32 %s3, 4
      %s647 = int_to_ptr.hbm [resolvable:$true] %s646
      %652 = dma.vmem_to_hbm [thread:$0]  %s645, 1024, %s647, [#allocation4], 64, 64, 4
    $region29: #{tpu_custom_call.1} parent=1 // pred_fallthru
      _
    // Predicated region
    $region30: #{tpu_custom_call.1} parent=1 // pred_check
      _
    $region31: #{tpu_custom_call.1} parent=1 // pred_check_branch
      %654 = sbr.rel (0) target = $region33
    $region32: #{tpu_custom_call.1} parent=1 // pred_region
      %656 = vsyncadd [#allocation10], 0
      %s657 = sshll.u32 [#allocation9], 4
      %s658 = int_to_ptr.vmem [resolvable:$true] %s657
      %s659 = sshll.u32 %s4, 4
      %s660 = int_to_ptr.hbm [resolvable:$true] %s659
      %665 = dma.vmem_to_hbm [thread:$0]  %s658, 1024, %s660, [#allocation10], 64, 64, 4
    $region33: #{tpu_custom_call.1} parent=1 // pred_fallthru
      _
    // Predicated region
    $region34: #{tpu_custom_call.1} parent=1 // pred_check
      _
    $region35: #{tpu_custom_call.1} parent=1 // pred_check_branch
      %667 = sbr.rel (0) target = $region37
    $region36: #{tpu_custom_call.1} parent=1 // pred_region
      %669 = vsyncadd [#allocation10], 0
      %s670 = sshll.u32 [#allocation11], 4
      %s671 = int_to_ptr.vmem [resolvable:$true] %s670
      %s672 = sshll.u32 %s5, 4
      %s673 = int_to_ptr.hbm [resolvable:$true] %s672
      %678 = dma.vmem_to_hbm [thread:$0]  %s671, 1024, %s673, [#allocation10], 64, 64, 4
    $region37: #{tpu_custom_call.1} parent=1 // pred_fallthru
      _
    // Predicated region
    $region38: #{tpu_custom_call.1} parent=1 // pred_check
      _
    $region39: #{tpu_custom_call.1} parent=1 // pred_check_branch
      %680 = sbr.rel (0) target = $region41
    $region40: #{tpu_custom_call.1} parent=1 // pred_region
      %682 = vsyncadd [#allocation13], 0
      %s683 = sshll.u32 [#allocation12], 4
      %s684 = int_to_ptr.vmem [resolvable:$true] %s683
      %s685 = sshll.u32 %s6, 4
      %s686 = int_to_ptr.hbm [resolvable:$true] %s685
      %691 = dma.vmem_to_hbm [thread:$0]  %s684, 2048, %s686, [#allocation13], 128, 128, 8
    $region41: #{tpu_custom_call.1} parent=1 // pred_fallthru
      _
    // Predicated region
    $region42: #{tpu_custom_call.1} parent=1 // pred_check
      _
    $region43: #{tpu_custom_call.1} parent=1 // pred_check_branch
      %693 = sbr.rel (0) target = $region45
    $region44: #{tpu_custom_call.1} parent=1 // pred_region
      %695 = dma.done [#allocation4], 1024
    $region45: #{tpu_custom_call.1} parent=1 // pred_fallthru
      _
    // Predicated region
    $region46: #{tpu_custom_call.1} parent=1 // pred_check
      _
    $region47: #{tpu_custom_call.1} parent=1 // pred_check_branch
      %697 = sbr.rel (0) target = $region49
    $region48: #{tpu_custom_call.1} parent=1 // pred_region
      %699 = dma.done [#allocation10], 1024
    $region49: #{tpu_custom_call.1} parent=1 // pred_fallthru
      _
    // Predicated region
    $region50: #{tpu_custom_call.1} parent=1 // pred_check
      _
    $region51: #{tpu_custom_call.1} parent=1 // pred_check_branch
      %701 = sbr.rel (0) target = $region53
    $region52: #{tpu_custom_call.1} parent=1 // pred_region
      %703 = dma.done [#allocation10], 1024
    $region53: #{tpu_custom_call.1} parent=1 // pred_fallthru
      _
    // Predicated region
    $region54: #{tpu_custom_call.1} parent=1 // pred_check
      _
    $region55: #{tpu_custom_call.1} parent=1 // pred_check_branch
      %705 = sbr.rel (0) target = $region57
    $region56: #{tpu_custom_call.1} parent=1 // pred_region
      %707 = dma.done [#allocation13], 2048
    $region57: #{tpu_custom_call.1} parent=1 // pred_fallthru
      _
    %708 = vsyncpa [#allocation3], 1
    %709 = vsyncpa [#allocation6], 1
    %710 = vsyncpa [#allocation4], 1
    %711 = vsyncpa [#allocation10], 1
    %712 = vsyncpa [#allocation13], 1

</llo_original>
